<compile_context>
chip_gen: v7x
topology: tpu7x:2x2x1
jax: 0.10.0
libtpu: 0.0.40
codegen_flags: <defaults>
</compile_context>

<pallas_src>
import functools

import jax
import jax.numpy as jnp
import numpy as np
from jax.experimental import pallas as pl
from jax.experimental.pallas import tpu as pltpu


def _round_up(x, m):
    return (x + m - 1) // m * m


def net_freeze_kernel(x_ref, w1_ref, b1_ref, w2_ref, b2_ref, w3_ref, b3_ref, o_ref,
                      *, strips):
    # Weights / biases: constant index map -> same VMEM block every grid step.
    w1 = w1_ref[...]
    b1 = b1_ref[...]
    w2 = w2_ref[...]
    b2 = b2_ref[...]
    w3 = w3_ref[...]
    b3 = b3_ref[...]

    # Strip-mine the batch tile into <=128-row strips (static slices) so the MXU work of
    # one strip can overlap the bias/tanh (VPU/EUP) of the previous one in the VLIW bundles.
    for start, rows in strips:
        xs = x_ref[pl.ds(start, rows), :]
        # --- H_model (frozen): Linear + tanh + Linear + tanh ---
        # Dots accumulate in f32 on the MXU; bias adds and tanh stay in f32.
        h = jnp.dot(xs, w1, preferred_element_type=jnp.float32) + b1
        h = jnp.tanh(h).astype(w2.dtype)
        h = jnp.dot(h, w2, preferred_element_type=jnp.float32) + b2
        h = jnp.tanh(h).astype(w3.dtype)
        # --- head_model: Linear ---
        y = jnp.dot(h, w3, preferred_element_type=jnp.float32) + b3
        o_ref[pl.ds(start, rows), :] = y.astype(o_ref.dtype)


def prepare_params(params, compute_dtype=jnp.bfloat16):
    """One-time prep of the *frozen* params: cast weights to the MXU operand dtype.

    Biases stay f32 (they are added after the f32-accumulating dot). Do this once at
    init, not per forward call.
    """
    w1, b1, w2, b2, w3, b3 = params
    cdt = jnp.dtype(compute_dtype)
    return (w1.astype(cdt), b1.astype(jnp.float32),
            w2.astype(cdt), b2.astype(jnp.float32),
            w3.astype(cdt), b3.astype(jnp.float32))


def net_freeze_forward(x, prepared_params, *, block_b=512):
    """Fused forward pass: grid over batch, un-padded feature dims, weights VMEM-resident."""
    w1, b1, w2, b2, w3, b3 = prepared_params   # w*: (in, out) cdt, b*: (1, out) f32
    B, IN = x.shape
    HID = w1.shape[1]
    OUT = w3.shape[1]
    cdt = jnp.dtype(w1.dtype)

    # Sublane packing multiple for the batch tile (f32: 8 rows, bf16: 16, 8-bit: 32).
    row_mult = 8 * (4 // cdt.itemsize)

    # Tile the batch; cap TB so the grid has >=2 steps whenever B allows it (v7x has
    # 2 TensorCores and "parallel" only helps with >=2 grid steps to shard).
    tb_req = _round_up(block_b, row_mult)
    tb_half = _round_up(-(-B // 2), row_mult)
    TB = max(row_mult, min(tb_req, tb_half))
    B_P = _round_up(B, TB)

    # Only the batch rows are padded (exact: padded rows are sliced off below). Feature
    # dims stay at their natural sizes -> no wrapper pad copies, minimal HBM traffic.
    xp = x.astype(cdt)
    if B_P != B:
        xp = jnp.pad(xp, ((0, B_P - B), (0, 0)))

    # Static strip schedule inside one batch tile (last strip may be ragged, but always
    # a multiple of row_mult since TB and 128 both are).
    STRIP = min(128, TB)
    strips = tuple((r, min(STRIP, TB - r)) for r in range(0, TB, STRIP))

    grid = (B_P // TB,)
    const = lambda i: (0, 0)       # weights/biases: same block every step -> loaded once
    batch = lambda i: (i, 0)       # x / out: stream one batch tile per grid step

    # Real (unpadded) traffic / flops for the scheduler.
    w_bytes = (w1.size + w2.size + w3.size) * cdt.itemsize
    b_bytes = (b1.size + b2.size + b3.size) * 4
    cost = pl.CostEstimate(
        flops=2 * B_P * (IN * HID + HID * HID + HID * OUT),
        transcendentals=2 * B_P * HID,
        bytes_accessed=B_P * IN * cdt.itemsize + w_bytes + b_bytes + B_P * OUT * 4,
    )

    # Explicit VMEM budget: double-buffered streamed tiles + (double-buffered) weights
    # + per-strip f32 intermediates, with generous slack; clamped to stay safe on v7x
    # (64 MiB physical) and at/above v5e's 16 MiB scoped default.
    stream_bytes = 2 * TB * IN * cdt.itemsize + 2 * TB * OUT * 4
    scratch_bytes = 4 * STRIP * max(HID, OUT) * 4
    needed = 2 * (w_bytes + b_bytes) + stream_bytes + scratch_bytes
    vmem_limit = int(min(48 << 20, max(16 << 20, 4 * needed)))

    out_padded = pl.pallas_call(
        functools.partial(net_freeze_kernel, strips=strips),
        out_shape=jax.ShapeDtypeStruct((B_P, OUT), jnp.float32),
        grid=grid,
        in_specs=[
            pl.BlockSpec((TB, IN), batch),    # x tile (streamed, double-buffered)
            pl.BlockSpec((IN, HID), const),   # w1 (VMEM-resident, frozen)
            pl.BlockSpec((1, HID), const),    # b1
            pl.BlockSpec((HID, HID), const),  # w2
            pl.BlockSpec((1, HID), const),    # b2
            pl.BlockSpec((HID, OUT), const),  # w3
            pl.BlockSpec((1, OUT), const),    # b3
        ],
        out_specs=pl.BlockSpec((TB, OUT), batch),
        compiler_params=pltpu.CompilerParams(
            dimension_semantics=("parallel",),   # shard batch tiles across TCs (v7x)
            vmem_limit_bytes=vmem_limit,
        ),
        cost_estimate=cost,
    )(xp, w1, b1, w2, b2, w3, b3)

    return out_padded[:B]


def init_params(key, in_dim, hid_dim, out_dim):
    """Deterministic synthetic parameters (PyTorch Linear shapes, then transposed)."""
    ks = jax.random.split(key, 6)
    # PyTorch: W is (out, in); we store W.T = (in, out) for the kernel.
    w1 = jax.random.normal(ks[0], (hid_dim, in_dim), jnp.float32) * 0.1
    b1 = jax.random.normal(ks[1], (hid_dim,), jnp.float32) * 0.1
    w2 = jax.random.normal(ks[2], (hid_dim, hid_dim), jnp.float32) * 0.1
    b2 = jax.random.normal(ks[3], (hid_dim,), jnp.float32) * 0.1
    w3 = jax.random.normal(ks[4], (out_dim, hid_dim), jnp.float32) * 0.1
    b3 = jax.random.normal(ks[5], (out_dim,), jnp.float32) * 0.1
    return (w1.T, b1.reshape(1, -1),
            w2.T, b2.reshape(1, -1),
            w3.T, b3.reshape(1, -1))


def reference_forward(x, params):
    """Pure-JAX reference mirroring the PyTorch composition H_model -> head_model."""
    w1, b1, w2, b2, w3, b3 = params
    h = jnp.tanh(x @ w1 + b1)       # H_model layer 1
    h = jnp.tanh(h @ w2 + b2)       # H_model layer 2
    return h @ w3 + b3              # head_model


if __name__ == "__main__":
    B, IN, HID, OUT = 8, 32, 64, 16   # small shapes consistent with an MLP holography net

    key = jax.random.PRNGKey(0)
    k_x, k_p, k_x2 = jax.random.split(key, 3)
    x = jax.random.normal(k_x, (B, IN), jnp.float32)
    params = init_params(k_p, IN, HID, OUT)

    ref = reference_forward(x, params)

    # f32 operand path (exact-semantics check against the PyTorch-equivalent reference).
    p_f32 = prepare_params(params, compute_dtype=jnp.float32)
    out_f32 = jax.block_until_ready(net_freeze_forward(x, p_f32))
    np.testing.assert_allclose(np.asarray(out_f32), np.asarray(ref), rtol=1e-5, atol=1e-5)

    # bf16 production path (default): bf16 MXU operands, f32 accumulation/bias/tanh.
    p_bf16 = prepare_params(params)   # bf16 is the default compute dtype
    out_bf16 = jax.block_until_ready(net_freeze_forward(x, p_bf16))
    np.testing.assert_allclose(np.asarray(out_bf16), np.asarray(ref), rtol=5e-2, atol=5e-2)

    # Multi-tile batch: exercises the streamed grid (>=2 steps for v7x) + ragged row pad.
    x2 = jax.random.normal(k_x2, (150, IN), jnp.float32)
    ref2 = reference_forward(x2, params)
    out2 = jax.block_until_ready(net_freeze_forward(x2, p_bf16))
    np.testing.assert_allclose(np.asarray(out2), np.asarray(ref2), rtol=5e-2, atol=5e-2)

    print("KERNEL_OK")
</pallas_src>

<mosaic_0001>
module attributes {stable_mosaic.version = 11 : i64} {
  func.func @net_freeze_kernel(%arg0: i32, %arg1: memref<8x32xf32, #tpu.memory_space<vmem>>, %arg2: memref<32x64xf32, #tpu.memory_space<vmem>>, %arg3: memref<1x64xf32, #tpu.memory_space<vmem>>, %arg4: memref<64x64xf32, #tpu.memory_space<vmem>>, %arg5: memref<1x64xf32, #tpu.memory_space<vmem>>, %arg6: memref<64x16xf32, #tpu.memory_space<vmem>>, %arg7: memref<1x16xf32, #tpu.memory_space<vmem>>, %arg8: memref<8x16xf32, #tpu.memory_space<vmem>>) attributes {dimension_semantics = [#tpu.dimension_semantics<parallel>], iteration_bounds = array<i64: 1>, scalar_prefetch = 0 : i64, scratch_operands = 0 : i64, tpu.core_type = #tpu.core_type<tc>, window_params = [{transform_indices = @transform_0, window_bounds = array<i64: 8, 32>}, {pipeline_mode = #tpu.pipeline_mode<synchronous>, transform_indices = @transform_1, window_bounds = array<i64: 32, 64>}, {pipeline_mode = #tpu.pipeline_mode<synchronous>, transform_indices = @transform_2, window_bounds = array<i64: 1, 64>}, {pipeline_mode = #tpu.pipeline_mode<synchronous>, transform_indices = @transform_3, window_bounds = array<i64: 64, 64>}, {pipeline_mode = #tpu.pipeline_mode<synchronous>, transform_indices = @transform_4, window_bounds = array<i64: 1, 64>}, {pipeline_mode = #tpu.pipeline_mode<synchronous>, transform_indices = @transform_5, window_bounds = array<i64: 64, 16>}, {pipeline_mode = #tpu.pipeline_mode<synchronous>, transform_indices = @transform_6, window_bounds = array<i64: 1, 16>}, {transform_indices = @transform_7, window_bounds = array<i64: 8, 16>}]} {
    %c0 = arith.constant 0 : index
    %c0_0 = arith.constant 0 : index
    %0 = vector.load %arg2[%c0, %c0_0] : memref<32x64xf32, #tpu.memory_space<vmem>>, vector<32x64xf32>
    %c0_1 = arith.constant 0 : index
    %c0_2 = arith.constant 0 : index
    %1 = vector.load %arg3[%c0_1, %c0_2] : memref<1x64xf32, #tpu.memory_space<vmem>>, vector<1x64xf32>
    %c0_3 = arith.constant 0 : index
    %c0_4 = arith.constant 0 : index
    %2 = vector.load %arg4[%c0_3, %c0_4] : memref<64x64xf32, #tpu.memory_space<vmem>>, vector<64x64xf32>
    %c0_5 = arith.constant 0 : index
    %c0_6 = arith.constant 0 : index
    %3 = vector.load %arg5[%c0_5, %c0_6] : memref<1x64xf32, #tpu.memory_space<vmem>>, vector<1x64xf32>
    %c0_7 = arith.constant 0 : index
    %c0_8 = arith.constant 0 : index
    %4 = vector.load %arg6[%c0_7, %c0_8] : memref<64x16xf32, #tpu.memory_space<vmem>>, vector<64x16xf32>
    %c0_9 = arith.constant 0 : index
    %c0_10 = arith.constant 0 : index
    %5 = vector.load %arg7[%c0_9, %c0_10] : memref<1x16xf32, #tpu.memory_space<vmem>>, vector<1x16xf32>
    %c0_11 = arith.constant 0 : index
    %c0_12 = arith.constant 0 : index
    %6 = vector.load %arg1[%c0_11, %c0_12] : memref<8x32xf32, #tpu.memory_space<vmem>>, vector<8x32xf32>
    %cst = arith.constant dense<0.000000e+00> : vector<8x64xf32>
    %7 = tpu.matmul %6, %0, %cst {dimension_numbers = #tpu.dot_dimension_numbers<[1], [0], [0], [1], [0, 0, 1, 1], [], []>} : vector<8x32xf32>, vector<32x64xf32>, vector<8x64xf32> -> vector<8x64xf32>
    %8 = vector.broadcast %1 : vector<1x64xf32> to vector<8x64xf32>
    %9 = arith.addf %7, %8 : vector<8x64xf32>
    %10 = math.tanh %9 : vector<8x64xf32>
    %cst_13 = arith.constant dense<0.000000e+00> : vector<8x64xf32>
    %11 = tpu.matmul %10, %2, %cst_13 {dimension_numbers = #tpu.dot_dimension_numbers<[1], [0], [0], [1], [0, 0, 1, 1], [], []>} : vector<8x64xf32>, vector<64x64xf32>, vector<8x64xf32> -> vector<8x64xf32>
    %12 = vector.broadcast %3 : vector<1x64xf32> to vector<8x64xf32>
    %13 = arith.addf %11, %12 : vector<8x64xf32>
    %14 = math.tanh %13 : vector<8x64xf32>
    %cst_14 = arith.constant dense<0.000000e+00> : vector<8x16xf32>
    %15 = tpu.matmul %14, %4, %cst_14 {dimension_numbers = #tpu.dot_dimension_numbers<[1], [0], [0], [1], [0, 0, 1, 1], [], []>} : vector<8x64xf32>, vector<64x16xf32>, vector<8x16xf32> -> vector<8x16xf32>
    %16 = vector.broadcast %5 : vector<1x16xf32> to vector<8x16xf32>
    %17 = arith.addf %15, %16 : vector<8x16xf32>
    %c0_15 = arith.constant 0 : index
    %c0_16 = arith.constant 0 : index
    %18 = vector.load %arg8[%c0_15, %c0_16] : memref<8x16xf32, #tpu.memory_space<vmem>>, vector<8x16xf32>
    tpu.vector_store %arg8[%c0_15, %c0_16], %17 {strides = array<i32>} : memref<8x16xf32, #tpu.memory_space<vmem>>, vector<8x16xf32>,
    return
  }
  func.func @transform_0(%arg0: i32) -> (i32, i32) {
    %c0_i32 = arith.constant 0 : i32
    %c0_i32_0 = arith.constant 0 : i32
    return %arg0, %c0_i32 : i32, i32
  }
  func.func @transform_1(%arg0: i32) -> (i32, i32) {
    %c0_i32 = arith.constant 0 : i32
    %c0_i32_0 = arith.constant 0 : i32
    %c0_i32_1 = arith.constant 0 : i32
    return %c0_i32, %c0_i32_0 : i32, i32
  }
  func.func @transform_2(%arg0: i32) -> (i32, i32) {
    %c0_i32 = arith.constant 0 : i32
    %c0_i32_0 = arith.constant 0 : i32
    %c0_i32_1 = arith.constant 0 : i32
    return %c0_i32, %c0_i32_0 : i32, i32
  }
  func.func @transform_3(%arg0: i32) -> (i32, i32) {
    %c0_i32 = arith.constant 0 : i32
    %c0_i32_0 = arith.constant 0 : i32
    %c0_i32_1 = arith.constant 0 : i32
    return %c0_i32, %c0_i32_0 : i32, i32
  }
  func.func @transform_4(%arg0: i32) -> (i32, i32) {
    %c0_i32 = arith.constant 0 : i32
    %c0_i32_0 = arith.constant 0 : i32
    %c0_i32_1 = arith.constant 0 : i32
    return %c0_i32, %c0_i32_0 : i32, i32
  }
  func.func @transform_5(%arg0: i32) -> (i32, i32) {
    %c0_i32 = arith.constant 0 : i32
    %c0_i32_0 = arith.constant 0 : i32
    %c0_i32_1 = arith.constant 0 : i32
    return %c0_i32, %c0_i32_0 : i32, i32
  }
  func.func @transform_6(%arg0: i32) -> (i32, i32) {
    %c0_i32 = arith.constant 0 : i32
    %c0_i32_0 = arith.constant 0 : i32
    %c0_i32_1 = arith.constant 0 : i32
    return %c0_i32, %c0_i32_0 : i32, i32
  }
  func.func @transform_7(%arg0: i32) -> (i32, i32) {
    %c0_i32 = arith.constant 0 : i32
    %c0_i32_0 = arith.constant 0 : i32
    return %arg0, %c0_i32 : i32, i32
  }
}

</mosaic_0001>

<llo_original>
// kernel: tpu_custom_call.1
$region0: #{tpu_custom_call.1}
  #allocation0 [shape = 'u32[]', space=smem, size = 0x4, offset = 0x4, fixed_abs, tag = 'smem constant byte address 0x4 - core index']
  #allocation1 [shape = 'u32[144,128]{1,0:T(1,128)}', space=vmem, size = 0x12000, scoped, tag = 'internal scratch']
  %s0 = inlined_call_operand.vmem [shape: f32[8,32], index: 0, kind: input, shape index: {}]
  %s1 = inlined_call_operand.hbm [shape: f32[32,64], index: 1, kind: input, shape index: {}]
  %s2 = inlined_call_operand.vmem [shape: f32[1,64], index: 2, kind: input, shape index: {}]
  %s3 = inlined_call_operand.vmem [shape: f32[64,64], index: 3, kind: input, shape index: {}]
  %s4 = inlined_call_operand.vmem [shape: f32[1,64], index: 4, kind: input, shape index: {}]
  %s5 = inlined_call_operand.vmem [shape: f32[64,16], index: 5, kind: input, shape index: {}]
  %s6 = inlined_call_operand.vmem [shape: f32[1,16], index: 6, kind: input, shape index: {}]
  %s7 = inlined_call_operand.hbm [shape: f32[8,16], index: 7, kind: output, shape index: {}]
  %s8 = sld [smem:[#allocation0]]
  $region42: #{tpu_custom_call.1} parent=0
    _
  %s10 = ssub.s32 1, %s8
  %s11 = scalar_select 0, %s10, %s8
  $region1: #{tpu_custom_call.1} parent=0
    #allocation2 [shape = 'u8[16384]{0}', space=vmem, size = 0x4000, scoped, tag = 'input window, operand 1, single buffered']
    #allocation3 [shape = 's32[1]{0}', space=sflag, size = 0x4, scoped, tag = 'scoped memory for tpu_custom_call.1']
    #allocation4 [shape = 's32[1]{0}', space=sflag, size = 0x4, scoped, tag = 'scoped memory for tpu_custom_call.1']
    #allocation5 [shape = 'u8[4096]{0}', space=vmem, size = 0x1000, scoped, tag = 'output window, operand 0, single buffered']
    %12 = vsyncpa [#allocation3], 0
    %13 = vsyncpa [#allocation4], 0
    // Predicated region
    $region2: #{tpu_custom_call.1} parent=1 // pred_check
      _
    $region3: #{tpu_custom_call.1} parent=1 // pred_check_branch
      %15 = sbr.rel (0) target = $region5
    $region4: #{tpu_custom_call.1} parent=1 // pred_region
      _
    $region5: #{tpu_custom_call.1} parent=1 // pred_fallthru
      _
    // Predicated region
    $region6: #{tpu_custom_call.1} parent=1 // pred_check
      _
    $region7: #{tpu_custom_call.1} parent=1 // pred_check_branch
      %17 = sbr.rel (0) target = $region9
    $region8: #{tpu_custom_call.1} parent=1 // pred_region
      %s19 = ssub.s32 512, 512
      %20 = vsyncadd [#allocation3], %s19
      %s21 = sshll.u32 [#allocation2], 4
      %s22 = int_to_ptr.vmem [resolvable:$true] %s21
      %27 = dma.hbm_to_vmem [thread:$0]  %s1, 512, %s22, [#allocation3], 128, 128, 8
    $region9: #{tpu_custom_call.1} parent=1 // pred_fallthru
      _
    // Predicated region
    $region10: #{tpu_custom_call.1} parent=1 // pred_check
      _
    $region11: #{tpu_custom_call.1} parent=1 // pred_check_branch
      %29 = sbr.rel (0) target = $region13
    $region12: #{tpu_custom_call.1} parent=1 // pred_region
      _
    $region13: #{tpu_custom_call.1} parent=1 // pred_fallthru
      _
    // Predicated region
    $region14: #{tpu_custom_call.1} parent=1 // pred_check
      _
    $region15: #{tpu_custom_call.1} parent=1 // pred_check_branch
      %31 = sbr.rel (0) target = $region17
    $region16: #{tpu_custom_call.1} parent=1 // pred_region
      _
    $region17: #{tpu_custom_call.1} parent=1 // pred_fallthru
      _
    // Predicated region
    $region18: #{tpu_custom_call.1} parent=1 // pred_check
      _
    $region19: #{tpu_custom_call.1} parent=1 // pred_check_branch
      %33 = sbr.rel (0) target = $region21
    $region20: #{tpu_custom_call.1} parent=1 // pred_region
      _
    $region21: #{tpu_custom_call.1} parent=1 // pred_fallthru
      _
    // Predicated region
    $region22: #{tpu_custom_call.1} parent=1 // pred_check
      _
    $region23: #{tpu_custom_call.1} parent=1 // pred_check_branch
      %35 = sbr.rel (0) target = $region25
    $region24: #{tpu_custom_call.1} parent=1 // pred_region
      _
    $region25: #{tpu_custom_call.1} parent=1 // pred_fallthru
      _
    // Predicated region
    $region26: #{tpu_custom_call.1} parent=1 // pred_check
      _
    $region27: #{tpu_custom_call.1} parent=1 // pred_check_branch
      %37 = sbr.rel (0) target = $region29
    $region28: #{tpu_custom_call.1} parent=1 // pred_region
      _
    $region29: #{tpu_custom_call.1} parent=1 // pred_fallthru
      _
    // Predicated region
    $region30: #{tpu_custom_call.1} parent=1 // pred_check
      _
    $region31: #{tpu_custom_call.1} parent=1 // pred_check_branch
      %39 = sbr.rel (0) target = $region33
    $region32: #{tpu_custom_call.1} parent=1 // pred_region
      %40 = dma.done [#allocation3], 512
    $region33: #{tpu_custom_call.1} parent=1 // pred_fallthru
      _
    %v41 = vld [vmem:[#allocation2] sm:$0xff]
    %v42 = vld [vmem:[#allocation2 + $0x8] sm:$0xff]
    %v43 = vld [vmem:[#allocation2 + $0x10] sm:$0xff]
    %v44 = vld [vmem:[#allocation2 + $0x18] sm:$0xff]
    %v45 = vld [vmem:[%s2] sm:$0x1]
    %v46 = vld [vmem:[%s3] sm:$0xff]
    %v47 = vld [vmem:[%s3 + $0x8] sm:$0xff]
    %v48 = vld [vmem:[%s3 + $0x10] sm:$0xff]
    %v49 = vld [vmem:[%s3 + $0x18] sm:$0xff]
    %v50 = vld [vmem:[%s3 + $0x20] sm:$0xff]
    %v51 = vld [vmem:[%s3 + $0x28] sm:$0xff]
    %v52 = vld [vmem:[%s3 + $0x30] sm:$0xff]
    %v53 = vld [vmem:[%s3 + $0x38] sm:$0xff]
    %v54 = vld [vmem:[%s4] sm:$0x1]
    %v55 = vld [vmem:[%s5] sm:$0xff]
    %v56 = vld [vmem:[%s5 + $0x8] sm:$0xff]
    %v57 = vld [vmem:[%s5 + $0x10] sm:$0xff]
    %v58 = vld [vmem:[%s5 + $0x18] sm:$0xff]
    %v59 = vld [vmem:[%s5 + $0x20] sm:$0xff]
    %v60 = vld [vmem:[%s5 + $0x28] sm:$0xff]
    %v61 = vld [vmem:[%s5 + $0x30] sm:$0xff]
    %v62 = vld [vmem:[%s5 + $0x38] sm:$0xff]
    %v63 = vld [vmem:[%s6] sm:$0x1]
    %v64 = vld [vmem:[%s0] sm:$0xff]
    %v66 = vlaneseq
    %v67 = vshrl.u32 %v66, 7
    %v68 = vsub.s32 0, %v67
    %v69 = vrot.slane %v45, %v68
    %vm71 = vcmask 261120
    %v73 = vsel %vm71, %v64, 0
    %75 = vmatprep.subr.mxu0 0.0
    %76 = vmatpush1.msra.mxu0 %v41
    %77 = vmatprep.subr.mxu0 0.0
    %78 = vmatpush1.msra.mxu0 %v42
    %79 = vmatprep.subr.mxu0 0.0
    %80 = vmatpush1.msra.mxu0 %v43
    %81 = vmatprep.subr.mxu0 0.0
    %82 = vmatpush1.msra.mxu0 %v44
    %83 = vmatprep.subr.mxu0 0.0
    %84 = vmatpush1.msra.mxu0 0.0
    %85 = vmatprep.subr.mxu0 0.0
    %86 = vmatpush1.msra.mxu0 0.0
    %87 = vmatprep.subr.mxu0 0.0
    %88 = vmatpush1.msra.mxu0 0.0
    %89 = vmatprep.subr.mxu0 0.0
    %90 = vmatpush1.msra.mxu0 0.0
    %91 = vmatprep.subr.mxu0 0.0
    %92 = vmatpush1.msra.mxu0 0.0
    %93 = vmatprep.subr.mxu0 0.0
    %94 = vmatpush1.msra.mxu0 0.0
    %95 = vmatprep.subr.mxu0 0.0
    %96 = vmatpush1.msra.mxu0 0.0
    %97 = vmatprep.subr.mxu0 0.0
    %98 = vmatpush1.msra.mxu0 0.0
    %99 = vmatprep.subr.mxu0 0.0
    %100 = vmatpush1.msra.mxu0 0.0
    %101 = vmatprep.subr.mxu0 0.0
    %102 = vmatpush1.msra.mxu0 0.0
    %103 = vmatprep.subr.mxu0 0.0
    %104 = vmatpush1.msra.mxu0 0.0
    %105 = vmatprep.subr.mxu0 0.0
    %106 = vmatpush1.msra.mxu0 0.0
    %107 = vmatprep.subr.mxu0 0.0
    %108 = vmatpush1.msra.mxu0 0.0
    %109 = vmatprep.subr.mxu0 0.0
    %110 = vmatpush1.msra.mxu0 0.0
    %111 = vmatprep.subr.mxu0 0.0
    %112 = vmatpush1.msra.mxu0 0.0
    %113 = vmatprep.subr.mxu0 0.0
    %114 = vmatpush1.msra.mxu0 0.0
    %115 = vmatprep.subr.mxu0 0.0
    %116 = vmatpush1.msra.mxu0 0.0
    %117 = vmatprep.subr.mxu0 0.0
    %118 = vmatpush1.msra.mxu0 0.0
    %119 = vmatprep.subr.mxu0 0.0
    %120 = vmatpush1.msra.mxu0 0.0
    %121 = vmatprep.subr.mxu0 0.0
    %122 = vmatpush1.msra.mxu0 0.0
    %123 = vmatprep.subr.mxu0 0.0
    %124 = vmatpush1.msra.mxu0 0.0
    %125 = vmatprep.subr.mxu0 0.0
    %126 = vmatpush1.msra.mxu0 0.0
    %127 = vmatprep.subr.mxu0 0.0
    %128 = vmatpush1.msra.mxu0 0.0
    %129 = vmatprep.subr.mxu0 0.0
    %130 = vmatpush1.msra.mxu0 0.0
    %131 = vmatprep.subr.mxu0 0.0
    %132 = vmatpush1.msra.mxu0 0.0
    %133 = vmatprep.subr.mxu0 0.0
    %134 = vmatpush1.msra.mxu0 0.0
    %135 = vmatprep.subr.mxu0 0.0
    %136 = vmatpush1.msra.mxu0 0.0
    %137 = vmatprep.subr.mxu0 0.0
    %138 = vmatpush1.msra.mxu0 0.0
    %139 = vmatprep.mubr.f32.mxu0 0.0
    %140 = vmatmul.mubr.f32.gmra.mrb[0].mxu0 %v73
    %v141 = vpop.f32.mrb[0].mxu0
    %v142 = vadd.f32 %v69, %v141
    %v143 = vpop.f32.mrb[0].mxu0
    %144 = vdwg.mxu0
    %v145 = vtanh.pop %v142
    %v147 = vlaneseq
    %v148 = vshrl.u32 %v147, 7
    %v149 = vsub.s32 0, %v148
    %v150 = vrot.slane %v54, %v149
    %vm152 = vcmask 523264
    %v154 = vsel %vm152, %v145, 0
    %156 = vmatprep.subr.mxu0 0.0
    %157 = vmatpush1.msra.mxu0 %v46
    %158 = vmatprep.subr.mxu0 0.0
    %159 = vmatpush1.msra.mxu0 %v47
    %160 = vmatprep.subr.mxu0 0.0
    %161 = vmatpush1.msra.mxu0 %v48
    %162 = vmatprep.subr.mxu0 0.0
    %163 = vmatpush1.msra.mxu0 %v49
    %164 = vmatprep.subr.mxu0 0.0
    %165 = vmatpush1.msra.mxu0 %v50
    %166 = vmatprep.subr.mxu0 0.0
    %167 = vmatpush1.msra.mxu0 %v51
    %168 = vmatprep.subr.mxu0 0.0
    %169 = vmatpush1.msra.mxu0 %v52
    %170 = vmatprep.subr.mxu0 0.0
    %171 = vmatpush1.msra.mxu0 %v53
    %172 = vmatprep.subr.mxu0 0.0
    %173 = vmatpush1.msra.mxu0 0.0
    %174 = vmatprep.subr.mxu0 0.0
    %175 = vmatpush1.msra.mxu0 0.0
    %176 = vmatprep.subr.mxu0 0.0
    %177 = vmatpush1.msra.mxu0 0.0
    %178 = vmatprep.subr.mxu0 0.0
    %179 = vmatpush1.msra.mxu0 0.0
    %180 = vmatprep.subr.mxu0 0.0
    %181 = vmatpush1.msra.mxu0 0.0
    %182 = vmatprep.subr.mxu0 0.0
    %183 = vmatpush1.msra.mxu0 0.0
    %184 = vmatprep.subr.mxu0 0.0
    %185 = vmatpush1.msra.mxu0 0.0
    %186 = vmatprep.subr.mxu0 0.0
    %187 = vmatpush1.msra.mxu0 0.0
    %188 = vmatprep.subr.mxu0 0.0
    %189 = vmatpush1.msra.mxu0 0.0
    %190 = vmatprep.subr.mxu0 0.0
    %191 = vmatpush1.msra.mxu0 0.0
    %192 = vmatprep.subr.mxu0 0.0
    %193 = vmatpush1.msra.mxu0 0.0
    %194 = vmatprep.subr.mxu0 0.0
    %195 = vmatpush1.msra.mxu0 0.0
    %196 = vmatprep.subr.mxu0 0.0
    %197 = vmatpush1.msra.mxu0 0.0
    %198 = vmatprep.subr.mxu0 0.0
    %199 = vmatpush1.msra.mxu0 0.0
    %200 = vmatprep.subr.mxu0 0.0
    %201 = vmatpush1.msra.mxu0 0.0
    %202 = vmatprep.subr.mxu0 0.0
    %203 = vmatpush1.msra.mxu0 0.0
    %204 = vmatprep.subr.mxu0 0.0
    %205 = vmatpush1.msra.mxu0 0.0
    %206 = vmatprep.subr.mxu0 0.0
    %207 = vmatpush1.msra.mxu0 0.0
    %208 = vmatprep.subr.mxu0 0.0
    %209 = vmatpush1.msra.mxu0 0.0
    %210 = vmatprep.subr.mxu0 0.0
    %211 = vmatpush1.msra.mxu0 0.0
    %212 = vmatprep.subr.mxu0 0.0
    %213 = vmatpush1.msra.mxu0 0.0
    %214 = vmatprep.subr.mxu0 0.0
    %215 = vmatpush1.msra.mxu0 0.0
    %216 = vmatprep.subr.mxu0 0.0
    %217 = vmatpush1.msra.mxu0 0.0
    %218 = vmatprep.subr.mxu0 0.0
    %219 = vmatpush1.msra.mxu0 0.0
    %220 = vmatprep.mubr.f32.mxu0 0.0
    %221 = vmatmul.mubr.f32.gmra.mrb[0].mxu0 %v154
    %v222 = vpop.f32.mrb[0].mxu0
    %v223 = vadd.f32 %v150, %v222
    %v224 = vpop.f32.mrb[0].mxu0
    %225 = vdwg.mxu0
    %v226 = vtanh.pop %v223
    %v228 = vlaneseq
    %v229 = vshrl.u32 %v228, 7
    %v230 = vsub.s32 0, %v229
    %v231 = vrot.slane %v63, %v230
    %v234 = vsel %vm152, %v226, 0
    %236 = vmatprep.subr.mxu0 0.0
    %237 = vmatpush1.msra.mxu0 %v55
    %238 = vmatprep.subr.mxu0 0.0
    %239 = vmatpush1.msra.mxu0 %v56
    %240 = vmatprep.subr.mxu0 0.0
    %241 = vmatpush1.msra.mxu0 %v57
    %242 = vmatprep.subr.mxu0 0.0
    %243 = vmatpush1.msra.mxu0 %v58
    %244 = vmatprep.subr.mxu0 0.0
    %245 = vmatpush1.msra.mxu0 %v59
    %246 = vmatprep.subr.mxu0 0.0
    %247 = vmatpush1.msra.mxu0 %v60
    %248 = vmatprep.subr.mxu0 0.0
    %249 = vmatpush1.msra.mxu0 %v61
    %250 = vmatprep.subr.mxu0 0.0
    %251 = vmatpush1.msra.mxu0 %v62
    %252 = vmatprep.subr.mxu0 0.0
    %253 = vmatpush1.msra.mxu0 0.0
    %254 = vmatprep.subr.mxu0 0.0
    %255 = vmatpush1.msra.mxu0 0.0
    %256 = vmatprep.subr.mxu0 0.0
    %257 = vmatpush1.msra.mxu0 0.0
    %258 = vmatprep.subr.mxu0 0.0
    %259 = vmatpush1.msra.mxu0 0.0
    %260 = vmatprep.subr.mxu0 0.0
    %261 = vmatpush1.msra.mxu0 0.0
    %262 = vmatprep.subr.mxu0 0.0
    %263 = vmatpush1.msra.mxu0 0.0
    %264 = vmatprep.subr.mxu0 0.0
    %265 = vmatpush1.msra.mxu0 0.0
    %266 = vmatprep.subr.mxu0 0.0
    %267 = vmatpush1.msra.mxu0 0.0
    %268 = vmatprep.subr.mxu0 0.0
    %269 = vmatpush1.msra.mxu0 0.0
    %270 = vmatprep.subr.mxu0 0.0
    %271 = vmatpush1.msra.mxu0 0.0
    %272 = vmatprep.subr.mxu0 0.0
    %273 = vmatpush1.msra.mxu0 0.0
    %274 = vmatprep.subr.mxu0 0.0
    %275 = vmatpush1.msra.mxu0 0.0
    %276 = vmatprep.subr.mxu0 0.0
    %277 = vmatpush1.msra.mxu0 0.0
    %278 = vmatprep.subr.mxu0 0.0
    %279 = vmatpush1.msra.mxu0 0.0
    %280 = vmatprep.subr.mxu0 0.0
    %281 = vmatpush1.msra.mxu0 0.0
    %282 = vmatprep.subr.mxu0 0.0
    %283 = vmatpush1.msra.mxu0 0.0
    %284 = vmatprep.subr.mxu0 0.0
    %285 = vmatpush1.msra.mxu0 0.0
    %286 = vmatprep.subr.mxu0 0.0
    %287 = vmatpush1.msra.mxu0 0.0
    %288 = vmatprep.subr.mxu0 0.0
    %289 = vmatpush1.msra.mxu0 0.0
    %290 = vmatprep.subr.mxu0 0.0
    %291 = vmatpush1.msra.mxu0 0.0
    %292 = vmatprep.subr.mxu0 0.0
    %293 = vmatpush1.msra.mxu0 0.0
    %294 = vmatprep.subr.mxu0 0.0
    %295 = vmatpush1.msra.mxu0 0.0
    %296 = vmatprep.subr.mxu0 0.0
    %297 = vmatpush1.msra.mxu0 0.0
    %298 = vmatprep.subr.mxu0 0.0
    %299 = vmatpush1.msra.mxu0 0.0
    %300 = vmatprep.mubr.f32.mxu0 0.0
    %301 = vmatmul.mubr.f32.gmra.mrb[0].mxu0 %v234
    %v302 = vpop.f32.mrb[0].mxu0
    %v303 = vadd.f32 %v231, %v302
    %v304 = vpop.f32.mrb[0].mxu0
    %305 = vdwg.mxu0
    %vm306 = vcmask 130048
    %307 = vst.msk [vmem:[#allocation5] sm:$0xff] %vm306, %v303
    // Predicated region
    $region34: #{tpu_custom_call.1} parent=1 // pred_check
      _
    $region35: #{tpu_custom_call.1} parent=1 // pred_check_branch
      %309 = sbr.rel (0) target = $region37
    $region36: #{tpu_custom_call.1} parent=1 // pred_region
      %s311 = ssub.s32 128, 128
      %312 = vsyncadd [#allocation4], %s311
      %s314 = sshll.u32 [#allocation5], 4
      %s315 = int_to_ptr.vmem [resolvable:$true] %s314
      %317 = dma.vmem_to_hbm [thread:$0]  %s315, 128, %s7, [#allocation4]
    $region37: #{tpu_custom_call.1} parent=1 // pred_fallthru
      _
    // Predicated region
    $region38: #{tpu_custom_call.1} parent=1 // pred_check
      _
    $region39: #{tpu_custom_call.1} parent=1 // pred_check_branch
      %319 = sbr.rel (0) target = $region41
    $region40: #{tpu_custom_call.1} parent=1 // pred_region
      %320 = dma.done [#allocation4], 128
    $region41: #{tpu_custom_call.1} parent=1 // pred_fallthru
      _
    %321 = vsyncpa [#allocation3], 1
    %322 = vsyncpa [#allocation4], 1

</llo_original>
